<compile_context>
chip_gen: v6e
topology: v6e:2x2x1
jax: 0.10.0
libtpu: 0.0.40
codegen_flags: <defaults>
</compile_context>

<pallas_src>
import jax
import jax.numpy as jnp
from jax.experimental import pallas as pl
from jax.experimental.pallas import tpu as pltpu


def _round_up(x, m):
    return ((x + m - 1) // m) * m


def _vmem_budget():
    """(tiling budget, physical/limit cap) in bytes, generation-aware."""
    try:
        cap = int(pltpu.get_tpu_info().vmem_capacity_bytes)
    except Exception:  # pragma: no cover - conservative fallback (v7x per-TC size)
        cap = 64 << 20
    budget = min(int(cap * 0.78), cap - (24 << 20))  # ~40 MiB @64 MiB, ~100 MiB @128 MiB
    budget = max(budget, 24 << 20)
    return budget, cap


def _linear_logsoftmax_kernel(x_ref, w_ref, b_ref, o_ref, acc_ref):
    k = pl.program_id(1)

    @pl.when(k == 0)
    def _():
        acc_ref[...] = jnp.zeros_like(acc_ref)

    # bf16 x bf16 -> f32 accumulate on the MXU; weight already in [D, C] layout.
    acc_ref[...] += jnp.dot(
        x_ref[...], w_ref[...], preferred_element_type=jnp.float32
    )

    @pl.when(k == pl.num_programs(1) - 1)
    def _():
        logits = acc_ref[...] + b_ref[...]          # f32 bias folded in once
        m = jnp.max(logits, axis=-1, keepdims=True)
        s = jnp.sum(jnp.exp(logits - m), axis=-1, keepdims=True)
        lse = m + jnp.log(s)
        o_ref[...] = (logits - lse).astype(o_ref.dtype)


def make_linear_logsoftmax(weight, bias, *, feed_dtype=jnp.bfloat16):
    """Pre-pads / transposes / casts the weight once; returns jitted apply(x).

    weight: [C, D] (PyTorch nn.Linear convention), bias: [C].
    apply(x): x [B, D] -> log_softmax(x @ weight.T + bias, axis=1), shape [B, C].
    """
    C, D = weight.shape
    assert bias.shape == (C,)

    # Lane-dense class axis; bump to 256-multiples when C > 128 so the trailing
    # MXU tile stays full-width on the 256-wide v6e/v7x MXUs.
    C_pad = _round_up(C, 128)
    if C_pad > 128 and C_pad % 256 != 0:
        C_pad = _round_up(C, 256)
    D_pad = _round_up(D, 128)

    # One-time weight prep (hoisted out of the per-call path): [D_pad, C_pad] bf16.
    wp = jnp.pad(weight.T.astype(feed_dtype), ((0, D_pad - D), (0, C_pad - C)))
    # Bias stays f32; padded classes get -1e30 so exp underflows to exactly 0.
    bp = jnp.pad(
        bias.astype(jnp.float32)[None, :],
        ((0, 0), (0, C_pad - C)),
        constant_values=-1e30,
    )

    budget, cap = _vmem_budget()
    feed_bytes = jnp.dtype(feed_dtype).itemsize

    def apply(x):
        B, Dx = x.shape
        if Dx != D:
            raise ValueError(f"expected input feature dim {D}, got {Dx}")
        out_dtype = x.dtype
        out_bytes = jnp.dtype(out_dtype).itemsize

        def vmem_bytes(tb, tk):
            return (2 * tb * tk * feed_bytes          # x double buffer
                    + 2 * C_pad * tk * feed_bytes     # weight double buffer
                    + 2 * C_pad * 4                   # bias
                    + 2 * tb * C_pad * out_bytes      # output double buffer
                    + tb * C_pad * 4)                 # f32 accumulator scratch

        # ---- batch tile: up to 256 rows; >= 2 tiles when B > 8 (v7x megacore).
        B8 = _round_up(max(B, 1), 8)
        if B8 <= 8:
            TB = B8
        else:
            TB = min(256, _round_up(pl.cdiv(B8, 2), 8))
            while TB > 8 and vmem_bytes(TB, 128) > budget:
                TB = max(8, _round_up(TB // 2, 8))
        B_pad = _round_up(B8, TB)

        # ---- K tile: prefer the whole weight VMEM-resident (single K step,
        # weight DMA'd once).  Otherwise pick the largest 128-multiple divisor
        # of D_pad that fits, so zero-padding along D is never inflated.
        if vmem_bytes(TB, D_pad) <= budget:
            TK = D_pad
        else:
            n = D_pad // 128
            TK = 128
            for g in sorted((g for g in range(1, n + 1) if n % g == 0), reverse=True):
                tk = 128 * g
                if tk <= 2048 and vmem_bytes(TB, tk) <= budget:
                    TK = tk
                    break
            # TODO(synk): for vocab-scale C add a class-axis grid dimension with
            # a two-pass / online logsumexp instead of relying on TK/TB shrink.

        num_b = B_pad // TB
        num_k = D_pad // TK
        w_streams = 1 if num_k == 1 else num_b   # weight re-read per batch tile only if K is tiled
        cost = pl.CostEstimate(
            flops=2 * B_pad * D_pad * C_pad,
            transcendentals=2 * B_pad * C_pad,   # exp + log
            bytes_accessed=(B_pad * D_pad * feed_bytes
                            + w_streams * C_pad * D_pad * feed_bytes
                            + B_pad * C_pad * out_bytes
                            + C_pad * 4),
        )

        need = vmem_bytes(TB, TK)
        vmem_limit = int(min(cap, max(32 << 20, need + (8 << 20))))

        # Only x is padded per call; skip the copy when already aligned.
        xp = x.astype(feed_dtype)
        if (B_pad, D_pad) != (B, D):
            xp = jnp.pad(xp, ((0, B_pad - B), (0, D_pad - D)))

        out = pl.pallas_call(
            _linear_logsoftmax_kernel,
            out_shape=jax.ShapeDtypeStruct((B_pad, C_pad), out_dtype),
            grid_spec=pltpu.PrefetchScalarGridSpec(
                num_scalar_prefetch=0,
                grid=(num_b, num_k),
                in_specs=[
                    pl.BlockSpec((TB, TK), lambda i, k: (i, k)),     # x tile
                    pl.BlockSpec((TK, C_pad), lambda i, k: (k, 0)),  # weight tile [D, C]
                    pl.BlockSpec((1, C_pad), lambda i, k: (0, 0)),   # f32 bias row
                ],
                out_specs=pl.BlockSpec((TB, C_pad), lambda i, k: (i, 0)),
                scratch_shapes=[pltpu.VMEM((TB, C_pad), jnp.float32)],
            ),
            compiler_params=pltpu.CompilerParams(
                # batch tiles shard across TensorCores; K is a sequential
                # reduction into the resident f32 VMEM accumulator.
                dimension_semantics=("parallel", "arbitrary"),
                vmem_limit_bytes=vmem_limit,
            ),
            cost_estimate=cost,
        )(xp, wp, bp)

        return out[:B, :C]

    return jax.jit(apply)


def linear_logsoftmax(x, weight, bias, *, feed_dtype=jnp.bfloat16):
    """One-shot convenience wrapper (prefer make_linear_logsoftmax for reuse)."""
    return make_linear_logsoftmax(weight, bias, feed_dtype=feed_dtype)(x)


if __name__ == "__main__":
    key = jax.random.PRNGKey(0)
    batch, input_dim, nclass = 8, 32, 16

    kx, kw, kb = jax.random.split(key, 3)
    x = jax.random.normal(kx, (batch, input_dim), dtype=jnp.float32)
    # Deterministic init mimicking nn.Linear (uniform in +-1/sqrt(input_dim))
    bound = 1.0 / (input_dim ** 0.5)
    weight = jax.random.uniform(
        kw, (nclass, input_dim), minval=-bound, maxval=bound, dtype=jnp.float32
    )
    bias = jax.random.uniform(
        kb, (nclass,), minval=-bound, maxval=bound, dtype=jnp.float32
    )

    fwd = make_linear_logsoftmax(weight, bias)   # bf16 feed, f32 accumulate/epilogue
    out = fwd(x)
    jax.block_until_ready(out)

    # Reference 1: same bf16 input rounding, f32 math (what the MXU computes).
    xb = x.astype(jnp.bfloat16).astype(jnp.float32)
    wb = weight.astype(jnp.bfloat16).astype(jnp.float32)
    ref_bf16 = jax.nn.log_softmax(xb @ wb.T + bias, axis=1)
    # Reference 2: full-f32 PyTorch-equivalent forward.
    ref_f32 = jax.nn.log_softmax(x @ weight.T + bias, axis=1)

    assert out.shape == ref_f32.shape, "shape mismatch vs reference"
    assert jnp.allclose(out, ref_bf16, atol=1e-4, rtol=1e-4), "mismatch vs bf16-feed reference"
    assert jnp.allclose(out, ref_f32, atol=3e-2, rtol=3e-2), "mismatch vs f32 reference"

    print("KERNEL_OK")
</pallas_src>

<mosaic_0001>
module attributes {stable_mosaic.version = 11 : i64} {
  func.func @_linear_logsoftmax_kernel(%arg0: i32, %arg1: i32, %arg2: memref<8x128xbf16, #tpu.memory_space<vmem>>, %arg3: memref<128x128xbf16, #tpu.memory_space<vmem>>, %arg4: memref<1x128xf32, #tpu.memory_space<vmem>>, %arg5: memref<8x128xf32, #tpu.memory_space<vmem>>, %arg6: memref<8x128xf32, #tpu.memory_space<vmem>>) attributes {dimension_semantics = [#tpu.dimension_semantics<parallel>, #tpu.dimension_semantics<arbitrary>], iteration_bounds = array<i64: 1, 1>, scalar_prefetch = 0 : i64, scratch_operands = 1 : i64, tpu.core_type = #tpu.core_type<tc>, window_params = [{transform_indices = @transform_0, window_bounds = array<i64: 8, 128>}, {transform_indices = @transform_1, window_bounds = array<i64: 128, 128>}, {pipeline_mode = #tpu.pipeline_mode<synchronous>, transform_indices = @transform_2, window_bounds = array<i64: 1, 128>}, {transform_indices = @transform_3, window_bounds = array<i64: 8, 128>}]} {
    %c0_i32 = arith.constant 0 : i32
    %0 = arith.cmpi eq, %arg1, %c0_i32 : i32
    %1 = arith.extui %0 : i1 to i32
    %c0_i32_0 = arith.constant 0 : i32
    %2 = arith.cmpi ne, %1, %c0_i32_0 : i32
    scf.if %2 {
      %cst_10 = arith.constant 0.000000e+00 : f32
      %12 = vector.broadcast %cst_10 : f32 to vector<8x128xf32>
      %c0_11 = arith.constant 0 : index
      %c0_12 = arith.constant 0 : index
      %13 = vector.load %arg6[%c0_11, %c0_12] : memref<8x128xf32, #tpu.memory_space<vmem>>, vector<8x128xf32>
      tpu.vector_store %arg6[%c0_11, %c0_12], %12 {strides = array<i32>} : memref<8x128xf32, #tpu.memory_space<vmem>>, vector<8x128xf32>,
    } else {
    }
    %c0 = arith.constant 0 : index
    %c0_1 = arith.constant 0 : index
    %3 = vector.load %arg6[%c0, %c0_1] : memref<8x128xf32, #tpu.memory_space<vmem>>, vector<8x128xf32>
    %c0_2 = arith.constant 0 : index
    %c0_3 = arith.constant 0 : index
    %4 = vector.load %arg2[%c0_2, %c0_3] : memref<8x128xbf16, #tpu.memory_space<vmem>>, vector<8x128xbf16>
    %c0_4 = arith.constant 0 : index
    %c0_5 = arith.constant 0 : index
    %5 = vector.load %arg3[%c0_4, %c0_5] : memref<128x128xbf16, #tpu.memory_space<vmem>>, vector<128x128xbf16>
    %cst = arith.constant dense<0.000000e+00> : vector<8x128xf32>
    %6 = tpu.matmul %4, %5, %cst {dimension_numbers = #tpu.dot_dimension_numbers<[1], [0], [0], [1], [0, 0, 1, 1], [], []>} : vector<8x128xbf16>, vector<128x128xbf16>, vector<8x128xf32> -> vector<8x128xf32>
    %7 = arith.addf %3, %6 : vector<8x128xf32>
    %c0_6 = arith.constant 0 : index
    %c0_7 = arith.constant 0 : index
    %8 = vector.load %arg6[%c0_6, %c0_7] : memref<8x128xf32, #tpu.memory_space<vmem>>, vector<8x128xf32>
    tpu.vector_store %arg6[%c0_6, %c0_7], %7 {strides = array<i32>} : memref<8x128xf32, #tpu.memory_space<vmem>>, vector<8x128xf32>,
    %c0_i32_8 = arith.constant 0 : i32
    %9 = arith.cmpi eq, %arg1, %c0_i32_8 : i32
    %10 = arith.extui %9 : i1 to i32
    %c0_i32_9 = arith.constant 0 : i32
    %11 = arith.cmpi ne, %10, %c0_i32_9 : i32
    scf.if %11 {
      %c0_10 = arith.constant 0 : index
      %c0_11 = arith.constant 0 : index
      %12 = vector.load %arg6[%c0_10, %c0_11] : memref<8x128xf32, #tpu.memory_space<vmem>>, vector<8x128xf32>
      %c0_12 = arith.constant 0 : index
      %c0_13 = arith.constant 0 : index
      %13 = vector.load %arg4[%c0_12, %c0_13] : memref<1x128xf32, #tpu.memory_space<vmem>>, vector<1x128xf32>
      %14 = vector.broadcast %13 : vector<1x128xf32> to vector<8x128xf32>
      %15 = arith.addf %12, %14 : vector<8x128xf32>
      %cst_14 = arith.constant dense<0xFF800000> : vector<8xf32>
      %16 = vector.multi_reduction <maximumf>, %15, %cst_14 [1] : vector<8x128xf32> to vector<8xf32>
      %17 = vector.shape_cast %16 : vector<8xf32> to vector<8x1xf32>
      %18 = vector.broadcast %17 : vector<8x1xf32> to vector<8x128xf32>
      %19 = arith.subf %15, %18 : vector<8x128xf32>
      %20 = math.exp %19 : vector<8x128xf32>
      %cst_15 = arith.constant dense<0.000000e+00> : vector<8xf32>
      %21 = vector.multi_reduction <add>, %20, %cst_15 [1] : vector<8x128xf32> to vector<8xf32>
      %22 = vector.shape_cast %21 : vector<8xf32> to vector<8x1xf32>
      %23 = math.log %22 : vector<8x1xf32>
      %24 = arith.addf %17, %23 : vector<8x1xf32>
      %25 = vector.broadcast %24 : vector<8x1xf32> to vector<8x128xf32>
      %26 = arith.subf %15, %25 : vector<8x128xf32>
      %c0_16 = arith.constant 0 : index
      %c0_17 = arith.constant 0 : index
      %27 = vector.load %arg5[%c0_16, %c0_17] : memref<8x128xf32, #tpu.memory_space<vmem>>, vector<8x128xf32>
      tpu.vector_store %arg5[%c0_16, %c0_17], %26 {strides = array<i32>} : memref<8x128xf32, #tpu.memory_space<vmem>>, vector<8x128xf32>,
    } else {
    }
    return
  }
  func.func @transform_0(%arg0: i32, %arg1: i32) -> (i32, i32) {
    %c0_i32 = arith.constant 0 : i32
    return %arg0, %arg1 : i32, i32
  }
  func.func @transform_1(%arg0: i32, %arg1: i32) -> (i32, i32) {
    %c0_i32 = arith.constant 0 : i32
    %c0_i32_0 = arith.constant 0 : i32
    return %arg1, %c0_i32 : i32, i32
  }
  func.func @transform_2(%arg0: i32, %arg1: i32) -> (i32, i32) {
    %c0_i32 = arith.constant 0 : i32
    %c0_i32_0 = arith.constant 0 : i32
    %c0_i32_1 = arith.constant 0 : i32
    return %c0_i32, %c0_i32_0 : i32, i32
  }
  func.func @transform_3(%arg0: i32, %arg1: i32) -> (i32, i32) {
    %c0_i32 = arith.constant 0 : i32
    %c0_i32_0 = arith.constant 0 : i32
    return %arg0, %c0_i32 : i32, i32
  }
}

</mosaic_0001>

<llo_original>
// kernel: apply.1
$region0: #{apply.1}
  #allocation0 [shape = 'u32[]', space=smem, size = 0x4, offset = 0x4, fixed_abs, tag = 'smem constant byte address 0x4 - core index']
  #allocation1 [shape = 'u32[144,128]{1,0:T(1,128)}', space=vmem, size = 0x12000, scoped, tag = 'internal scratch']
  #allocation2 [shape = 'f32[8,128]{1,0:T(8,128)}', space=vmem, size = 0x1000, scoped, tag = 'scratch operand']
  %s0 = inlined_call_operand.vmem [shape: bf16[8,128], index: 0, kind: input, shape index: {}]
  %s1 = inlined_call_operand.hbm [shape: bf16[128,128], index: 1, kind: input, shape index: {}]
  %s2 = inlined_call_operand.vmem [shape: f32[1,128], index: 2, kind: input, shape index: {}]
  %s3 = inlined_call_operand.hbm [shape: f32[8,128], index: 3, kind: output, shape index: {}]
  %s4 = sld [smem:[#allocation0]]
  $region34: #{apply.1} parent=0
    _
  %s6 = ssub.s32 1, %s4
  %s7 = scalar_select 0, %s6, %s4
  $region1: #{apply.1} parent=0
    #allocation3 [shape = 'u8[32768]{0}', space=vmem, size = 0x8000, scoped, tag = 'input window, operand 1, single buffered']
    #allocation4 [shape = 's32[1]{0}', space=sflag, size = 0x4, scoped, tag = 'scoped memory for apply.1']
    #allocation5 [shape = 's32[1]{0}', space=sflag, size = 0x4, scoped, tag = 'scoped memory for apply.1']
    #allocation6 [shape = 'u8[4096]{0}', space=vmem, size = 0x1000, scoped, tag = 'output window, operand 0, single buffered']
    %8 = vsyncpa [#allocation4], 0
    %9 = vsyncpa [#allocation5], 0
    // Predicated region
    $region2: #{apply.1} parent=1 // pred_check
      _
    $region3: #{apply.1} parent=1 // pred_check_branch
      %11 = sbr.rel (0) target = $region5
    $region4: #{apply.1} parent=1 // pred_region
      _
    $region5: #{apply.1} parent=1 // pred_fallthru
      _
    // Predicated region
    $region6: #{apply.1} parent=1 // pred_check
      _
    $region7: #{apply.1} parent=1 // pred_check_branch
      %13 = sbr.rel (0) target = $region9
    $region8: #{apply.1} parent=1 // pred_region
      %s15 = ssub.s32 1024, 1024
      %16 = vsyncadd [#allocation4], %s15
      %s17 = sshll.u32 [#allocation3], 4
      %s18 = int_to_ptr.vmem [resolvable:$true] %s17
      %23 = dma.hbm_to_vmem [thread:$0]  %s1, 1024, %s18, [#allocation4], 64, 64, 4
    $region9: #{apply.1} parent=1 // pred_fallthru
      _
    // Predicated region
    $region10: #{apply.1} parent=1 // pred_check
      _
    $region11: #{apply.1} parent=1 // pred_check_branch
      %25 = sbr.rel (0) target = $region13
    $region12: #{apply.1} parent=1 // pred_region
      _
    $region13: #{apply.1} parent=1 // pred_fallthru
      _
    // Predicated region
    $region14: #{apply.1} parent=1 // pred_check
      _
    $region15: #{apply.1} parent=1 // pred_check_branch
      %27 = sbr.rel (0) target = $region17
    $region16: #{apply.1} parent=1 // pred_region
      %28 = dma.done [#allocation4], 1024
    $region17: #{apply.1} parent=1 // pred_fallthru
      _
    %p30 = scmp.eq.s32.totalorder 0, 0
    // Predicated region
    $region18: #{apply.1} parent=1 // pred_check
      %p31 = pneg %p30
    $region19: #{apply.1} parent=1 // pred_check_branch
      %33 = sbr.rel (%p31) target = $region21
    $region20: #{apply.1} parent=1 // pred_region
      %34 = vst [vmem:[#allocation2] sm:$0xff] 0.0
    $region21: #{apply.1} parent=1 // pred_fallthru
      _
    %v35 = vld [vmem:[#allocation2] sm:$0xff]
    %v36 = vld [vmem:[%s0] sm:$0xf]
    %v37 = vld [vmem:[#allocation3] sm:$0xf]
    %v38 = vld [vmem:[#allocation3 + $0x4] sm:$0xf]
    %v39 = vld [vmem:[#allocation3 + $0x8] sm:$0xf]
    %v40 = vld [vmem:[#allocation3 + $0xc] sm:$0xf]
    %v41 = vld [vmem:[#allocation3 + $0x10] sm:$0xf]
    %v42 = vld [vmem:[#allocation3 + $0x14] sm:$0xf]
    %v43 = vld [vmem:[#allocation3 + $0x18] sm:$0xf]
    %v44 = vld [vmem:[#allocation3 + $0x1c] sm:$0xf]
    %v45 = vld [vmem:[#allocation3 + $0x20] sm:$0xf]
    %v46 = vld [vmem:[#allocation3 + $0x24] sm:$0xf]
    %v47 = vld [vmem:[#allocation3 + $0x28] sm:$0xf]
    %v48 = vld [vmem:[#allocation3 + $0x2c] sm:$0xf]
    %v49 = vld [vmem:[#allocation3 + $0x30] sm:$0xf]
    %v50 = vld [vmem:[#allocation3 + $0x34] sm:$0xf]
    %v51 = vld [vmem:[#allocation3 + $0x38] sm:$0xf]
    %v52 = vld [vmem:[#allocation3 + $0x3c] sm:$0xf]
    %v69 = vunpack.c.l.b16 %v37
    %v70 = vunpack.c.l.b16 %v38
    %v71 = vunpack.c.l.b16 %v39
    %v72 = vunpack.c.l.b16 %v40
    %v73 = vunpack.c.l.b16 %v41
    %v74 = vunpack.c.l.b16 %v42
    %v75 = vunpack.c.l.b16 %v43
    %v76 = vunpack.c.l.b16 %v44
    %v77 = vunpack.c.l.b16 %v45
    %v78 = vunpack.c.l.b16 %v46
    %v79 = vunpack.c.l.b16 %v47
    %v80 = vunpack.c.l.b16 %v48
    %v81 = vunpack.c.l.b16 %v49
    %v82 = vunpack.c.l.b16 %v50
    %v83 = vunpack.c.l.b16 %v51
    %v84 = vunpack.c.l.b16 %v52
    %v85 = vpack.c.b16 %v70, %v69
    %v86 = vpack.c.b16 %v72, %v71
    %v87 = vpack.c.b16 %v74, %v73
    %v88 = vpack.c.b16 %v76, %v75
    %v89 = vpack.c.b16 %v78, %v77
    %v90 = vpack.c.b16 %v80, %v79
    %v91 = vpack.c.b16 %v82, %v81
    %v92 = vpack.c.b16 %v84, %v83
    %101 = vmatprep.subr.bf16.mxu0 0
    %102 = vmatpush1.bf16.msra.mxu0 %v92
    %103 = vmatprep.subr.bf16.mxu0 0
    %104 = vmatpush1.bf16.msra.mxu0 %v91
    %105 = vmatprep.subr.bf16.mxu0 0
    %106 = vmatpush1.bf16.msra.mxu0 %v90
    %107 = vmatprep.subr.bf16.mxu0 0
    %108 = vmatpush1.bf16.msra.mxu0 %v89
    %109 = vmatprep.subr.bf16.mxu0 0
    %110 = vmatpush1.bf16.msra.mxu0 %v88
    %111 = vmatprep.subr.bf16.mxu0 0
    %112 = vmatpush1.bf16.msra.mxu0 %v87
    %113 = vmatprep.subr.bf16.mxu0 0
    %114 = vmatpush1.bf16.msra.mxu0 %v86
    %115 = vmatprep.subr.bf16.mxu0 0
    %116 = vmatpush1.bf16.msra.mxu0 %v85
    %117 = vmatprep.subr.bf16.mxu0 0
    %118 = vmatpush2.bf16.msra.mxu0 0
    %119 = vmatprep.subr.bf16.mxu0 0
    %120 = vmatpush2.bf16.msra.mxu0 0
    %121 = vmatprep.subr.bf16.mxu0 0
    %122 = vmatpush2.bf16.msra.mxu0 0
    %123 = vmatprep.subr.bf16.mxu0 0
    %124 = vmatpush2.bf16.msra.mxu0 0
    %125 = vmatprep.subr.bf16.mxu0 0
    %126 = vmatpush2.bf16.msra.mxu0 0
    %127 = vmatprep.subr.bf16.mxu0 0
    %128 = vmatpush2.bf16.msra.mxu0 0
    %129 = vmatprep.subr.bf16.mxu0 0
    %130 = vmatpush2.bf16.msra.mxu0 0
    %131 = vmatprep.subr.bf16.mxu0 0
    %132 = vmatpush2.bf16.msra.mxu0 0
    %133 = vmatprep.mubr.bf16.mxu0 0
    %134 = vmatmul.mubr.bf16.gmra.mxu0 %v36
    %v135 = vpop.f32.mrf.mxu0
    %v136 = vadd.f32 0.0, %v135
    %v137 = vpop.f32.mrf.mxu0
    %v138 = vpop.f32.mrf.mxu0
    %v139 = vpop.f32.mrf.mxu0
    %140 = vdwg.mxu0
    %v141 = vadd.f32 %v35, %v136
    %142 = vst [vmem:[#allocation2] sm:$0xff] %v141
    // Predicated region
    $region22: #{apply.1} parent=1 // pred_check
      %p143 = pneg %p30
    $region23: #{apply.1} parent=1 // pred_check_branch
      %145 = sbr.rel (%p143) target = $region25
    $region24: #{apply.1} parent=1 // pred_region
      %v146 = vld [vmem:[#allocation2] sm:$0xff]
      %v147 = vld [vmem:[%s2] sm:$0x1]
      %v149 = vlaneseq
      %v150 = vshrl.u32 %v149, 7
      %v151 = vsub.s32 0, %v150
      %v152 = vrot.slane %v147, %v151
      %v154 = vadd.f32 %v146, %v152
      %155 = vmax.xlane.f32.xlu0 %v154
      %v156 = vpop.xlane.xlu0 %155
      %v157 = vsub.f32 %v154, %v156
      %v158 = vmul.f32 %v157, 1.442695
      %v159 = vpow.pop %v158
      %160 = vadd.xlane.f32.xlu0 %v159
      %v161 = vpop.xlane.xlu0 %160
      %v162 = vlog2.pop %v161
      %v163 = vmul.f32 %v162, 0.6931472
      %v164 = vadd.f32 %v156, %v163
      %v165 = vsub.f32 %v154, %v164
      %166 = vst [vmem:[#allocation6] sm:$0xff] %v165
    $region25: #{apply.1} parent=1 // pred_fallthru
      _
    // Predicated region
    $region26: #{apply.1} parent=1 // pred_check
      _
    $region27: #{apply.1} parent=1 // pred_check_branch
      %168 = sbr.rel (0) target = $region29
    $region28: #{apply.1} parent=1 // pred_region
      %s170 = ssub.s32 128, 128
      %171 = vsyncadd [#allocation5], %s170
      %s173 = sshll.u32 [#allocation6], 4
      %s174 = int_to_ptr.vmem [resolvable:$true] %s173
      %176 = dma.vmem_to_hbm [thread:$0]  %s174, 128, %s3, [#allocation5]
    $region29: #{apply.1} parent=1 // pred_fallthru
      _
    // Predicated region
    $region30: #{apply.1} parent=1 // pred_check
      _
    $region31: #{apply.1} parent=1 // pred_check_branch
      %178 = sbr.rel (0) target = $region33
    $region32: #{apply.1} parent=1 // pred_region
      %179 = dma.done [#allocation5], 128
    $region33: #{apply.1} parent=1 // pred_fallthru
      _
    %180 = vsyncpa [#allocation4], 1
    %181 = vsyncpa [#allocation5], 1

</llo_original>
